<compile_context>
chip_gen: v7x
topology: tpu7x:2x2x1
jax: 0.10.0
libtpu: 0.0.40
codegen_flags: <defaults>
</compile_context>

<pallas_src>
import functools

import jax
import jax.numpy as jnp
import numpy as np
from jax.experimental import pallas as pl
from jax.experimental.pallas import tpu as pltpu


def _round_up(x: int, m: int) -> int:
    return ((x + m - 1) // m) * m


def _cdiv(a: int, b: int) -> int:
    return (a + b - 1) // b


def _matcher_cost_kernel(row_ref, col_ref, out_ref, *, w_span, w_giou):
    # row_ref: [TM, 8]  packed per-prediction quantities
    #   col 0: cx, 1: w, 2: x1, 3: x2, 4: bias (= w_giou + w_class * (-prob_fg))
    # col_ref: [8, T_pad]  packed per-target quantities
    #   row 0: cx, 1: w, 2: x1, 3: x2
    row = row_ref[...]
    col = col_ref[...]

    pcx = row[:, 0:1]
    pw = row[:, 1:2]
    p1 = row[:, 2:3]
    p2 = row[:, 3:4]
    bias = row[:, 4:5]

    tcx = col[0:1, :]
    tw = col[1:2, :]
    t1 = col[2:3, :]
    t2 = col[3:4, :]

    # L1 cdist in (cx, w) space -> [TM, T_pad]
    cost_span = jnp.abs(pcx - tcx) + jnp.abs(pw - tw)

    # temporal IoU / generalized IoU pieces (exact f32 divides)
    inter = jnp.maximum(jnp.minimum(p2, t2) - jnp.maximum(p1, t1), 0.0)
    union = pw + tw - inter
    enclose = jnp.maximum(p2, t2) - jnp.minimum(p1, t1)   # >= 0 given widths >= 0

    # C = w_span*cdist + w_giou*(-giou) + w_class*(-prob_fg)
    #   = w_span*cdist - w_giou*(inter/union + union/enclose) + bias
    out_ref[...] = (w_span * cost_span
                    - w_giou * (inter / union + union / enclose)
                    + bias)


@functools.partial(
    jax.jit,
    static_argnames=("cost_class", "cost_span", "cost_giou", "foreground_label"))
def hungarian_matcher_cost_padded(pred_logits, pred_spans, tgt_spans, *,
                                  cost_class=1.0, cost_span=1.0, cost_giou=1.0,
                                  foreground_label=0):
    """Returns the padded cost matrix of shape [n_pad, t_pad] (f32).

    The valid region is [:bs*num_queries, :num_targets]; trim on the host
    (e.g. right before linear_sum_assignment) to avoid re-streaming the whole
    matrix through HBM with lane-sparse masked stores.
    NOTE: the cost weights are compile-time constants of the kernel, so each
    distinct (cost_class, cost_span, cost_giou) triple retraces/recompiles.
    """
    bs, nq, num_classes = pred_logits.shape
    n = bs * nq
    t = tgt_spans.shape[0]

    # ---- O(N) / O(T) prep (fused into this jit program) ----
    logits = pred_logits.reshape(n, num_classes).astype(jnp.float32)
    m = jnp.max(logits, axis=-1, keepdims=True)
    lse = m[:, 0] + jnp.log(jnp.sum(jnp.exp(logits - m), axis=-1))
    prob_fg = jnp.exp(logits[:, foreground_label] - lse)       # softmax column
    bias = cost_giou - cost_class * prob_fg                     # w_g + w_c*(-p)

    spans = pred_spans.reshape(n, 2).astype(jnp.float32)
    pcx, pw = spans[:, 0], spans[:, 1]
    p1 = pcx - 0.5 * pw
    p2 = pcx + 0.5 * pw

    tgt = tgt_spans.astype(jnp.float32)
    tcx, tw = tgt[:, 0], tgt[:, 1]
    t1 = tcx - 0.5 * tw
    t2 = tcx + 0.5 * tw

    # ---- tiling: lane-dense T, row-tiled N ----
    t_pad = max(128, _round_up(t, 128))
    n8 = _round_up(n, 8)

    if n8 <= 512:
        tm = n8                                          # single step is fine
    else:
        # Even number (>=2) of row steps so both v7x TensorCores get work and
        # compute/writeback pipeline, while keeping output blocks <= ~2 MiB and
        # not smaller than ~256 KB.
        max_rows = max(512, (2 * 1024 * 1024) // (t_pad * 4))
        max_rows = max(8, (max_rows // 8) * 8)
        steps = max(2, _cdiv(n8, max_rows))
        if steps % 2:
            steps += 1
        tm = _round_up(_cdiv(n8, steps), 8)
    n_pad = _round_up(n8, tm)

    # ---- pack inputs: 2 DMAs per grid step ----
    # Padded rows/columns use (cx=0, w=1) -> x1=-0.5, x2=0.5, so union and
    # enclose stay strictly positive on the padded region (values are trimmed
    # on the host anyway).
    zeros_n = jnp.zeros_like(pcx)
    row_core = jnp.stack([pcx, pw, p1, p2, bias, zeros_n, zeros_n, zeros_n],
                         axis=-1)                                     # [n, 8]
    row_pad_vals = jnp.array([0.0, 1.0, -0.5, 0.5, 0.0, 0.0, 0.0, 0.0],
                             jnp.float32)
    row_packed = jnp.concatenate(
        [row_core, jnp.broadcast_to(row_pad_vals, (n_pad - n, 8))], axis=0)

    zeros_t = jnp.zeros_like(tcx)
    col_core = jnp.stack([tcx, tw, t1, t2, zeros_t, zeros_t, zeros_t, zeros_t],
                         axis=0)                                      # [8, t]
    col_pad_vals = row_pad_vals[:, None]                              # [8, 1]
    col_packed = jnp.concatenate(
        [col_core, jnp.broadcast_to(col_pad_vals, (8, t_pad - t))], axis=1)

    kernel = functools.partial(_matcher_cost_kernel,
                               w_span=float(cost_span),
                               w_giou=float(cost_giou))

    # VMEM footprint (double-buffered): output + packed-row + packed-col blocks.
    out_block = tm * t_pad * 4
    row_block = tm * 128 * 4            # (tm, 8) f32 tile padded to 128 lanes
    col_block = 8 * t_pad * 4
    vmem_bytes = min(100 * 1024 * 1024,
                     2 * (out_block + row_block + col_block) + (1 << 20))

    grid = (n_pad // tm,)
    return pl.pallas_call(
        kernel,
        out_shape=jax.ShapeDtypeStruct((n_pad, t_pad), jnp.float32),
        grid=grid,
        in_specs=[
            pl.BlockSpec((tm, 8), lambda i: (i, 0)),        # packed rows
            pl.BlockSpec((8, t_pad), lambda i: (0, 0)),     # packed targets
        ],
        out_specs=pl.BlockSpec((tm, t_pad), lambda i: (i, 0)),
        compiler_params=pltpu.CompilerParams(
            dimension_semantics=("parallel",),              # megacore on v7x
            vmem_limit_bytes=vmem_bytes,
        ),
    )(row_packed, col_packed)


def hungarian_matcher_cost(pred_logits, pred_spans, tgt_spans, **kw):
    """Host-side convenience: returns the trimmed [bs, nq, T] numpy cost matrix."""
    bs, nq, _ = pred_logits.shape
    t = tgt_spans.shape[0]
    c_pad = jax.block_until_ready(
        hungarian_matcher_cost_padded(pred_logits, pred_spans, tgt_spans, **kw))
    # Trim padding on the host (same place the original module moves C to CPU).
    return np.asarray(c_pad)[:bs * nq, :t].reshape(bs, nq, t)


def _reference_cost_numpy(pred_logits, pred_spans, tgt_spans,
                          cost_class=1.0, cost_span=1.0, cost_giou=1.0,
                          foreground_label=0):
    bs, nq, _ = pred_logits.shape
    logits = np.asarray(pred_logits, np.float32).reshape(bs * nq, -1)
    prob = np.exp(logits - logits.max(-1, keepdims=True))
    prob = prob / prob.sum(-1, keepdims=True)
    cc = -prob[:, foreground_label][:, None]

    spans = np.asarray(pred_spans, np.float32).reshape(bs * nq, 2)
    tgt = np.asarray(tgt_spans, np.float32)
    cs = np.abs(spans[:, None, :] - tgt[None, :, :]).sum(-1)

    def cxw_to_xx(s):
        return np.stack([s[:, 0] - 0.5 * s[:, 1], s[:, 0] + 0.5 * s[:, 1]], -1)

    a = cxw_to_xx(spans)
    b = cxw_to_xx(tgt)
    areas1 = a[:, 1] - a[:, 0]
    areas2 = b[:, 1] - b[:, 0]
    left = np.maximum(a[:, None, 0], b[None, :, 0])
    right = np.minimum(a[:, None, 1], b[None, :, 1])
    inter = np.clip(right - left, 0, None)
    union = areas1[:, None] + areas2[None, :] - inter
    iou = inter / union
    eleft = np.minimum(a[:, None, 0], b[None, :, 0])
    eright = np.maximum(a[:, None, 1], b[None, :, 1])
    enclose = np.clip(eright - eleft, 0, None)
    giou = iou - (enclose - union) / enclose

    C = cost_span * cs + cost_giou * (-giou) + cost_class * cc
    return C.reshape(bs, nq, -1)


if __name__ == "__main__":
    key = jax.random.PRNGKey(0)
    bs, num_queries, num_classes = 2, 8, 2
    tgt_sizes = [3, 3]                      # target spans per batch element
    total_t = sum(tgt_sizes)

    k1, k2, k3, k4 = jax.random.split(key, 4)
    pred_logits = jax.random.normal(k1, (bs, num_queries, num_classes), jnp.float32)
    # predicted spans in normalized (cx, w) format, widths strictly positive
    pred_cx = jax.nn.sigmoid(jax.random.normal(k2, (bs, num_queries)))
    pred_w = 0.05 + 0.4 * jax.nn.sigmoid(jax.random.normal(k3, (bs, num_queries)))
    pred_spans = jnp.stack([pred_cx, pred_w], axis=-1)
    # concatenated target spans (as torch.cat([v['spans'] for v in targets]))
    tgt_cx = jax.nn.sigmoid(jax.random.normal(k4, (total_t,)))
    tgt_w = 0.05 + 0.4 * jax.nn.sigmoid(
        jax.random.normal(jax.random.fold_in(k4, 1), (total_t,)))
    tgt_spans = jnp.stack([tgt_cx, tgt_w], axis=-1)

    C = hungarian_matcher_cost(pred_logits, pred_spans, tgt_spans,
                               cost_class=1.0, cost_span=1.0, cost_giou=1.0)

    C_ref = _reference_cost_numpy(pred_logits, pred_spans, tgt_spans)
    # Exact f32 divides in the kernel -> only f32 round-off differences remain.
    np.testing.assert_allclose(C, C_ref, rtol=1e-4, atol=1e-5)

    # TODO(synk): linear_sum_assignment (Hungarian algorithm) is a sequential,
    # data-dependent host-side step in the original module; no Pallas equivalent.
    try:
        from scipy.optimize import linear_sum_assignment
        offsets = np.cumsum([0] + tgt_sizes)
        indices = [linear_sum_assignment(C[i, :, offsets[i]:offsets[i + 1]])
                   for i in range(bs)]
        indices = [(np.asarray(i, np.int64), np.asarray(j, np.int64))
                   for i, j in indices]
    except ImportError:
        indices = None

    print("KERNEL_OK")
</pallas_src>

<mosaic_0001>
module attributes {stable_mosaic.version = 11 : i64} {
  func.func @_matcher_cost_kernel(%arg0: i32, %arg1: memref<16x8xf32, #tpu.memory_space<vmem>>, %arg2: memref<8x128xf32, #tpu.memory_space<vmem>>, %arg3: memref<16x128xf32, #tpu.memory_space<vmem>>) attributes {dimension_semantics = [#tpu.dimension_semantics<parallel>], iteration_bounds = array<i64: 1>, scalar_prefetch = 0 : i64, scratch_operands = 0 : i64, tpu.core_type = #tpu.core_type<tc>, window_params = [{transform_indices = @transform_0, window_bounds = array<i64: 16, 8>}, {pipeline_mode = #tpu.pipeline_mode<synchronous>, transform_indices = @transform_1, window_bounds = array<i64: 8, 128>}, {transform_indices = @transform_2, window_bounds = array<i64: 16, 128>}]} {
    %c0 = arith.constant 0 : index
    %c0_0 = arith.constant 0 : index
    %0 = vector.load %arg1[%c0, %c0_0] : memref<16x8xf32, #tpu.memory_space<vmem>>, vector<16x8xf32>
    %c0_1 = arith.constant 0 : index
    %c0_2 = arith.constant 0 : index
    %1 = vector.load %arg2[%c0_1, %c0_2] : memref<8x128xf32, #tpu.memory_space<vmem>>, vector<8x128xf32>
    %2 = vector.extract_strided_slice %0 {offsets = [0, 0], sizes = [16, 1], strides = [1, 1]} : vector<16x8xf32> to vector<16x1xf32>
    %3 = vector.extract_strided_slice %0 {offsets = [0, 1], sizes = [16, 1], strides = [1, 1]} : vector<16x8xf32> to vector<16x1xf32>
    %4 = vector.extract_strided_slice %0 {offsets = [0, 2], sizes = [16, 1], strides = [1, 1]} : vector<16x8xf32> to vector<16x1xf32>
    %5 = vector.extract_strided_slice %0 {offsets = [0, 3], sizes = [16, 1], strides = [1, 1]} : vector<16x8xf32> to vector<16x1xf32>
    %6 = vector.extract_strided_slice %0 {offsets = [0, 4], sizes = [16, 1], strides = [1, 1]} : vector<16x8xf32> to vector<16x1xf32>
    %7 = vector.extract_strided_slice %1 {offsets = [0, 0], sizes = [1, 128], strides = [1, 1]} : vector<8x128xf32> to vector<1x128xf32>
    %8 = vector.extract_strided_slice %1 {offsets = [1, 0], sizes = [1, 128], strides = [1, 1]} : vector<8x128xf32> to vector<1x128xf32>
    %9 = vector.extract_strided_slice %1 {offsets = [2, 0], sizes = [1, 128], strides = [1, 1]} : vector<8x128xf32> to vector<1x128xf32>
    %10 = vector.extract_strided_slice %1 {offsets = [3, 0], sizes = [1, 128], strides = [1, 1]} : vector<8x128xf32> to vector<1x128xf32>
    %11 = vector.broadcast %2 : vector<16x1xf32> to vector<16x128xf32>
    %12 = vector.broadcast %7 : vector<1x128xf32> to vector<16x128xf32>
    %13 = arith.subf %11, %12 : vector<16x128xf32>
    %14 = math.absf %13 : vector<16x128xf32>
    %15 = vector.broadcast %3 : vector<16x1xf32> to vector<16x128xf32>
    %16 = vector.broadcast %8 : vector<1x128xf32> to vector<16x128xf32>
    %17 = arith.subf %15, %16 : vector<16x128xf32>
    %18 = math.absf %17 : vector<16x128xf32>
    %19 = arith.addf %14, %18 : vector<16x128xf32>
    %20 = vector.broadcast %5 : vector<16x1xf32> to vector<16x128xf32>
    %21 = vector.broadcast %10 : vector<1x128xf32> to vector<16x128xf32>
    %22 = arith.minimumf %20, %21 : vector<16x128xf32>
    %23 = vector.broadcast %4 : vector<16x1xf32> to vector<16x128xf32>
    %24 = vector.broadcast %9 : vector<1x128xf32> to vector<16x128xf32>
    %25 = arith.maximumf %23, %24 : vector<16x128xf32>
    %26 = arith.subf %22, %25 : vector<16x128xf32>
    %cst = arith.constant 0.000000e+00 : f32
    %27 = vector.broadcast %cst : f32 to vector<16x128xf32>
    %28 = arith.maximumf %26, %27 : vector<16x128xf32>
    %29 = vector.broadcast %3 : vector<16x1xf32> to vector<16x128xf32>
    %30 = vector.broadcast %8 : vector<1x128xf32> to vector<16x128xf32>
    %31 = arith.addf %29, %30 : vector<16x128xf32>
    %32 = arith.subf %31, %28 : vector<16x128xf32>
    %33 = vector.broadcast %5 : vector<16x1xf32> to vector<16x128xf32>
    %34 = vector.broadcast %10 : vector<1x128xf32> to vector<16x128xf32>
    %35 = arith.maximumf %33, %34 : vector<16x128xf32>
    %36 = vector.broadcast %4 : vector<16x1xf32> to vector<16x128xf32>
    %37 = vector.broadcast %9 : vector<1x128xf32> to vector<16x128xf32>
    %38 = arith.minimumf %36, %37 : vector<16x128xf32>
    %39 = arith.subf %35, %38 : vector<16x128xf32>
    %cst_3 = arith.constant 1.000000e+00 : f32
    %40 = vector.broadcast %cst_3 : f32 to vector<16x128xf32>
    %41 = arith.mulf %40, %19 : vector<16x128xf32>
    %42 = arith.divf %28, %32 : vector<16x128xf32>
    %43 = arith.divf %32, %39 : vector<16x128xf32>
    %44 = arith.addf %42, %43 : vector<16x128xf32>
    %cst_4 = arith.constant 1.000000e+00 : f32
    %45 = vector.broadcast %cst_4 : f32 to vector<16x128xf32>
    %46 = arith.mulf %45, %44 : vector<16x128xf32>
    %47 = arith.subf %41, %46 : vector<16x128xf32>
    %48 = vector.broadcast %6 : vector<16x1xf32> to vector<16x128xf32>
    %49 = arith.addf %47, %48 : vector<16x128xf32>
    %c0_5 = arith.constant 0 : index
    %c0_6 = arith.constant 0 : index
    %50 = vector.load %arg3[%c0_5, %c0_6] : memref<16x128xf32, #tpu.memory_space<vmem>>, vector<16x128xf32>
    tpu.vector_store %arg3[%c0_5, %c0_6], %49 {strides = array<i32>} : memref<16x128xf32, #tpu.memory_space<vmem>>, vector<16x128xf32>,
    return
  }
  func.func @transform_0(%arg0: i32) -> (i32, i32) {
    %c0_i32 = arith.constant 0 : i32
    %c0_i32_0 = arith.constant 0 : i32
    return %arg0, %c0_i32 : i32, i32
  }
  func.func @transform_1(%arg0: i32) -> (i32, i32) {
    %c0_i32 = arith.constant 0 : i32
    %c0_i32_0 = arith.constant 0 : i32
    %c0_i32_1 = arith.constant 0 : i32
    return %c0_i32, %c0_i32_0 : i32, i32
  }
  func.func @transform_2(%arg0: i32) -> (i32, i32) {
    %c0_i32 = arith.constant 0 : i32
    %c0_i32_0 = arith.constant 0 : i32
    return %arg0, %c0_i32 : i32, i32
  }
}

</mosaic_0001>

<llo_original>
// kernel: hungarian_matcher_cost_padded.1
$region0: #{hungarian_matcher_cost_padded.1}
  #allocation0 [shape = 'u32[]', space=smem, size = 0x4, offset = 0x4, fixed_abs, tag = 'smem constant byte address 0x4 - core index']
  #allocation1 [shape = 'u32[144,128]{1,0:T(1,128)}', space=vmem, size = 0x12000, scoped, tag = 'internal scratch']
  %s0 = inlined_call_operand.vmem [shape: f32[16,8], index: 0, kind: input, shape index: {}]
  %s1 = inlined_call_operand.vmem [shape: f32[8,128], index: 1, kind: input, shape index: {}]
  %s2 = inlined_call_operand.hbm [shape: f32[16,128], index: 2, kind: output, shape index: {}]
  %s3 = sld [smem:[#allocation0]]
  $region18: #{hungarian_matcher_cost_padded.1} parent=0
    _
  %s5 = ssub.s32 1, %s3
  %s6 = scalar_select 0, %s5, %s3
  $region1: #{hungarian_matcher_cost_padded.1} parent=0
    #allocation2 [shape = 'u8[8192]{0}', space=vmem, size = 0x2000, scoped, tag = 'output window, operand 0, single buffered']
    #allocation3 [shape = 's32[1]{0}', space=sflag, size = 0x4, scoped, tag = 'scoped memory for hungarian_matcher_cost_padded.1']
    %7 = vsyncpa [#allocation3], 0
    // Predicated region
    $region2: #{hungarian_matcher_cost_padded.1} parent=1 // pred_check
      _
    $region3: #{hungarian_matcher_cost_padded.1} parent=1 // pred_check_branch
      %9 = sbr.rel (0) target = $region5
    $region4: #{hungarian_matcher_cost_padded.1} parent=1 // pred_region
      _
    $region5: #{hungarian_matcher_cost_padded.1} parent=1 // pred_fallthru
      _
    // Predicated region
    $region6: #{hungarian_matcher_cost_padded.1} parent=1 // pred_check
      _
    $region7: #{hungarian_matcher_cost_padded.1} parent=1 // pred_check_branch
      %11 = sbr.rel (0) target = $region9
    $region8: #{hungarian_matcher_cost_padded.1} parent=1 // pred_region
      _
    $region9: #{hungarian_matcher_cost_padded.1} parent=1 // pred_fallthru
      _
    %v12 = vld [vmem:[%s0] sm:$0xff]
    %v13 = vld [vmem:[%s0 + $0x8] sm:$0xff]
    %v14 = vld [vmem:[%s1] sm:$0xff]
    %16 = vset.pattern.permute.xlu0 0
    %17 = vperm.xlu0 %16, %v12
    %v18 = vpop.permute.xlu0 %17
    %21 = vset.pattern.permute.xlu0 0
    %22 = vperm.xlu0 %21, %v13
    %v23 = vpop.permute.xlu0 %22
    %v25 = vlaneseq
    %v26 = vshrl.u32 %v25, 7
    %v27 = vsub.s32 0, %v26
    %v28 = vrot.slane %v14, %v27
    %v29 = vsub.f32 %v18, %v28
    %v30 = vsub.f32 %v23, %v28
    %v31 = vand.u32 2147483647, %v29
    %v32 = vand.u32 2147483647, %v30
    %33 = vset.pattern.permute.xlu0 1
    %34 = vperm.xlu0 %33, %v12
    %v35 = vpop.permute.xlu0 %34
    %37 = vset.pattern.permute.xlu0 1
    %38 = vperm.xlu0 %37, %v13
    %v39 = vpop.permute.xlu0 %38
    %v41 = vlaneseq
    %v42 = vshrl.u32 %v41, 7
    %v43 = vsub.s32 1, %v42
    %v44 = vrot.slane %v14, %v43
    %v45 = vsub.f32 %v35, %v44
    %v46 = vsub.f32 %v39, %v44
    %v47 = vand.u32 2147483647, %v45
    %v48 = vand.u32 2147483647, %v46
    %v49 = vadd.f32 %v31, %v47
    %v50 = vadd.f32 %v32, %v48
    %51 = vset.pattern.permute.xlu0 3
    %52 = vperm.xlu0 %51, %v12
    %v53 = vpop.permute.xlu0 %52
    %55 = vset.pattern.permute.xlu0 3
    %56 = vperm.xlu0 %55, %v13
    %v57 = vpop.permute.xlu0 %56
    %v59 = vlaneseq
    %v60 = vshrl.u32 %v59, 7
    %v61 = vsub.s32 3, %v60
    %v62 = vrot.slane %v14, %v61
    %v63 = vmin.f32 %v53, %v62
    %v64 = vmin.f32 %v57, %v62
    %65 = vset.pattern.permute.xlu0 2
    %66 = vperm.xlu0 %65, %v12
    %v67 = vpop.permute.xlu0 %66
    %69 = vset.pattern.permute.xlu0 2
    %70 = vperm.xlu0 %69, %v13
    %v71 = vpop.permute.xlu0 %70
    %v73 = vlaneseq
    %v74 = vshrl.u32 %v73, 7
    %v75 = vsub.s32 2, %v74
    %v76 = vrot.slane %v14, %v75
    %v77 = vmax.f32 %v67, %v76
    %v78 = vmax.f32 %v71, %v76
    %v79 = vsub.f32 %v63, %v77
    %v80 = vsub.f32 %v64, %v78
    %v81 = vmax.f32 %v79, 0.0
    %v82 = vmax.f32 %v80, 0.0
    %v83 = vadd.f32 %v35, %v44
    %v84 = vadd.f32 %v39, %v44
    %v85 = vsub.f32 %v83, %v81
    %v86 = vsub.f32 %v84, %v82
    %v87 = vmax.f32 %v53, %v62
    %v88 = vmax.f32 %v57, %v62
    %v89 = vmin.f32 %v67, %v76
    %v90 = vmin.f32 %v71, %v76
    %v91 = vsub.f32 %v87, %v89
    %v92 = vsub.f32 %v88, %v90
    %v93 = vrcp.pop %v85
    %v94 = vmul.f32 %v81, %v93
    %v95 = vrcp.pop %v86
    %v96 = vmul.f32 %v82, %v95
    %v97 = vrcp.pop %v91
    %v98 = vmul.f32 %v85, %v97
    %v99 = vrcp.pop %v92
    %v100 = vmul.f32 %v86, %v99
    %v101 = vadd.f32 %v94, %v98
    %v102 = vadd.f32 %v96, %v100
    %v103 = vsub.f32 %v49, %v101
    %v104 = vsub.f32 %v50, %v102
    %105 = vset.pattern.permute.xlu0 4
    %106 = vperm.xlu0 %105, %v12
    %v107 = vpop.permute.xlu0 %106
    %109 = vset.pattern.permute.xlu0 4
    %110 = vperm.xlu0 %109, %v13
    %v111 = vpop.permute.xlu0 %110
    %v113 = vadd.f32 %v103, %v107
    %v114 = vadd.f32 %v104, %v111
    %115 = vst [vmem:[#allocation2] sm:$0xff] %v113
    %116 = vst [vmem:[#allocation2 + $0x8] sm:$0xff] %v114
    // Predicated region
    $region10: #{hungarian_matcher_cost_padded.1} parent=1 // pred_check
      _
    $region11: #{hungarian_matcher_cost_padded.1} parent=1 // pred_check_branch
      %118 = sbr.rel (0) target = $region13
    $region12: #{hungarian_matcher_cost_padded.1} parent=1 // pred_region
      %s120 = ssub.s32 256, 256
      %121 = vsyncadd [#allocation3], %s120
      %s122 = sshll.u32 [#allocation2], 4
      %s123 = int_to_ptr.vmem [resolvable:$true] %s122
      %128 = dma.vmem_to_hbm [thread:$0]  %s123, 256, %s2, [#allocation3], 128, 128, 8
    $region13: #{hungarian_matcher_cost_padded.1} parent=1 // pred_fallthru
      _
    // Predicated region
    $region14: #{hungarian_matcher_cost_padded.1} parent=1 // pred_check
      _
    $region15: #{hungarian_matcher_cost_padded.1} parent=1 // pred_check_branch
      %130 = sbr.rel (0) target = $region17
    $region16: #{hungarian_matcher_cost_padded.1} parent=1 // pred_region
      %131 = dma.done [#allocation3], 256
    $region17: #{hungarian_matcher_cost_padded.1} parent=1 // pred_fallthru
      _
    %132 = vsyncpa [#allocation3], 1

</llo_original>
